<compile_context>
chip_gen: v6e
topology: v6e:2x2x1
jax: 0.10.0
libtpu: 0.0.40
codegen_flags: <defaults>
</compile_context>

<pallas_src>
import functools

import jax
import jax.numpy as jnp
from jax import lax
from jax.experimental import pallas as pl
from jax.experimental.pallas import tpu as pltpu


def _round_up(x, m):
    return ((x + m - 1) // m) * m


def _pick_tile(dim_p, target):
    """Largest multiple of 128 <= target that divides dim_p (dim_p % 128 == 0)."""
    t = max(128, (min(target, dim_p) // 128) * 128)
    while dim_p % t != 0:
        t -= 128
    return t


# ---------------------------------------------------------------------------
# Kernel 1 (one-time parameter prep, amortized over all batch tiles):
# inputs already transposed to [in, out]; fuse the mask math elementwise.
# ---------------------------------------------------------------------------
def _masked_weight_t_kernel(wt_ref, mdt_ref, mot_ref, o_ref):
    w = wt_ref[...]
    o_ref[...] = jnp.exp(w) * mdt_ref[...] + w * mot_ref[...]


def _build_masked_weight_t(w_t, md_t, mo_t):
    in_p, out_p = w_t.shape
    bk = _pick_tile(in_p, 512)
    bn = _pick_tile(out_p, 512)
    spec = pl.BlockSpec((bk, bn), lambda k, j: (k, j))
    return pl.pallas_call(
        _masked_weight_t_kernel,
        out_shape=jax.ShapeDtypeStruct((in_p, out_p), jnp.float32),
        grid=(in_p // bk, out_p // bn),
        in_specs=[spec, spec, spec],
        out_specs=spec,
        compiler_params=pltpu.CompilerParams(
            dimension_semantics=("parallel", "parallel")),
    )(w_t, md_t, mo_t)


# ---------------------------------------------------------------------------
# Kernel 2: tiled matmul + bias + optional SinhArcsinh epilogue.
# ---------------------------------------------------------------------------
def _masked_linear_kernel(x_ref, wt_ref, b_ref, et_ref, sk_ref, o_ref, acc_ref,
                          *, use_sinharcsinh, matmul_dtype):
    k = pl.program_id(2)

    @pl.when(k == 0)
    def _():
        acc_ref[...] = jnp.zeros_like(acc_ref)

    acc_ref[...] += lax.dot_general(
        x_ref[...].astype(matmul_dtype),
        wt_ref[...].astype(matmul_dtype),
        dimension_numbers=(((1,), (0,)), ((), ())),
        preferred_element_type=jnp.float32,
    )

    @pl.when(k == pl.num_programs(2) - 1)
    def _():
        y = acc_ref[...] + b_ref[...]                      # [tm, tn] + [1, tn]
        if use_sinharcsinh:
            # Stable, exact asinh: sign(y) * log(|y| + sqrt(y^2 + 1)).
            ay = jnp.abs(y)
            asinh_y = jnp.sign(y) * jnp.log(ay + jnp.sqrt(ay * ay + 1.0))
            z = et_ref[...] * (sk_ref[...] + asinh_y)      # exp(tail) precomputed
            # Exact sinh: 0.5 * (exp(z) - exp(-z)).  (No approximate
            # reciprocal -- that was the source of the previous mismatch.)
            y = 0.5 * (jnp.exp(z) - jnp.exp(-z))
        o_ref[...] = y.astype(o_ref.dtype)


def masked_linear(x, weight, mask_d, mask_o, bias, tail, skewness,
                  info_SinhArcsinh, *, matmul_dtype=jnp.bfloat16):
    """Pallas TPU implementation of MaskedLinear.forward."""
    B, in_features = x.shape
    out_features = weight.shape[0]
    f32 = jnp.float32

    # --- pad to lane/sublane friendly shapes -------------------------------
    in_p = _round_up(in_features, 128)
    out_p = _round_up(out_features, 128)
    if B <= 256:                       # tiny batch: one batch tile (full B)
        tm = _round_up(B, 8)
        B_p = tm
    else:
        tm = 256
        B_p = _round_up(B, tm)
    tn = _pick_tile(out_p, 512)
    tk = _pick_tile(in_p, 512)

    x_p = jnp.zeros((B_p, in_p), f32).at[:B, :in_features].set(x.astype(f32))
    w_p = jnp.zeros((out_p, in_p), f32).at[:out_features, :in_features].set(
        weight.astype(f32))
    md_p = jnp.zeros((out_p, in_p), f32).at[:out_features, :in_features].set(
        mask_d.astype(f32))
    mo_p = jnp.zeros((out_p, in_p), f32).at[:out_features, :in_features].set(
        mask_o.astype(f32))
    b_p = jnp.zeros((1, out_p), f32).at[0, :out_features].set(bias.astype(f32))
    tail_p = jnp.zeros((1, out_p), f32).at[0, :out_features].set(tail.astype(f32))
    sk_p = jnp.zeros((1, out_p), f32).at[0, :out_features].set(
        skewness.astype(f32))
    # exp(tail) is batch independent: hoist it out of the kernel entirely.
    exp_tail_p = jnp.exp(tail_p)

    # One-time masked-weight build on the pre-transposed [in, out] layout.
    # (Padded rows/cols have W = masks = 0 -> exp(0)*0 + 0*0 = 0: no leakage.)
    wt_p = _build_masked_weight_t(w_p.T, md_p.T, mo_p.T)   # [in_p, out_p]

    kernel = functools.partial(
        _masked_linear_kernel,
        use_sinharcsinh=bool(info_SinhArcsinh),
        matmul_dtype=matmul_dtype)

    row_spec = pl.BlockSpec((1, tn), lambda i, j, k: (0, j))
    y_p = pl.pallas_call(
        kernel,
        out_shape=jax.ShapeDtypeStruct((B_p, out_p), x.dtype),
        grid=(B_p // tm, out_p // tn, in_p // tk),
        in_specs=[
            pl.BlockSpec((tm, tk), lambda i, j, k: (i, k)),   # x
            pl.BlockSpec((tk, tn), lambda i, j, k: (k, j)),   # masked W^T
            row_spec,                                         # bias
            row_spec,                                         # exp(tail)
            row_spec,                                         # skewness
        ],
        out_specs=pl.BlockSpec((tm, tn), lambda i, j, k: (i, j)),
        scratch_shapes=[pltpu.VMEM((tm, tn), jnp.float32)],
        compiler_params=pltpu.CompilerParams(
            dimension_semantics=("parallel", "parallel", "arbitrary"),
            vmem_limit_bytes=32 * 1024 * 1024),
    )(x_p, wt_p, b_p, exp_tail_p, sk_p)

    return y_p[:B, :out_features]


# ---------------------------------------------------------------------------
# Test harness
# ---------------------------------------------------------------------------
def _build_bnaf_masks(out_features, in_features, data_dim):
    """BNAF-style masks: mask_d block-diagonal, mask_o strictly block-lower."""
    assert out_features % data_dim == 0 and in_features % data_dim == 0
    ro = out_features // data_dim
    ci = in_features // data_dim
    rb = (jnp.arange(out_features) // ro)[:, None]
    cb = (jnp.arange(in_features) // ci)[None, :]
    mask_d = (rb == cb).astype(jnp.float32)
    mask_o = (rb > cb).astype(jnp.float32)
    return mask_d, mask_o


def _reference(x, weight, mask_d, mask_o, bias, tail, skewness, flag):
    mw = jnp.exp(weight) * mask_d + weight * mask_o
    y = x @ mw.T + bias
    if flag:
        y = jnp.sinh(jnp.exp(tail) * (skewness + jnp.arcsinh(y)))
    return y


if __name__ == "__main__":
    batch = 8
    in_features = 32
    out_features = 32
    data_dim = 4

    key = jax.random.PRNGKey(0)
    k_w, k_b, k_t, k_s, k_x = jax.random.split(key, 5)

    scale = jnp.sqrt(2.0 / (out_features + in_features))
    weight = jax.random.normal(k_w, (out_features, in_features), jnp.float32) * scale
    bias = jax.random.normal(k_b, (out_features,), jnp.float32) * scale
    tail = jax.random.normal(k_t, (out_features,), jnp.float32) * 0.1
    skewness = jax.random.normal(k_s, (out_features,), jnp.float32) * 0.1

    mask_d, mask_o = _build_bnaf_masks(out_features, in_features, data_dim)
    x = jax.random.normal(k_x, (batch, in_features), jnp.float32)

    # --- SinhArcsinh path ---------------------------------------------------
    ref = _reference(x, weight, mask_d, mask_o, bias, tail, skewness, True)

    # f32 MXU operands (tight-ish check; slack only for MXU rounding, which
    # sinh amplifies slightly).
    out_f32 = masked_linear(x, weight, mask_d, mask_o, bias, tail, skewness,
                            True, matmul_dtype=jnp.float32)
    out_f32 = jax.block_until_ready(out_f32)
    assert out_f32.shape == (batch, out_features)
    assert jnp.allclose(out_f32, ref, atol=1e-2, rtol=1e-2), \
        "f32 path mismatch vs reference"

    # Production path: bf16 MXU operands, f32 accumulation (looser tolerance,
    # dominated by bf16 operand rounding amplified through sinh).
    out_bf16 = masked_linear(x, weight, mask_d, mask_o, bias, tail, skewness,
                             True, matmul_dtype=jnp.bfloat16)
    out_bf16 = jax.block_until_ready(out_bf16)
    assert out_bf16.shape == (batch, out_features)
    assert jnp.allclose(out_bf16, ref, atol=1.5e-1, rtol=1.5e-1), \
        "bf16 path mismatch vs reference"

    # --- plain linear path (info_SinhArcsinh == False) -----------------------
    zeros = jnp.zeros((out_features,), jnp.float32)
    ref_lin = _reference(x, weight, mask_d, mask_o, bias, zeros, zeros, False)
    out_lin = masked_linear(x, weight, mask_d, mask_o, bias, zeros, zeros,
                            False, matmul_dtype=jnp.float32)
    out_lin = jax.block_until_ready(out_lin)
    assert out_lin.shape == (batch, out_features)
    assert jnp.allclose(out_lin, ref_lin, atol=1e-2, rtol=1e-2), \
        "linear path mismatch vs reference"

    print("KERNEL_OK")
</pallas_src>

<mosaic_0001>
module attributes {stable_mosaic.version = 11 : i64} {
  func.func @_masked_weight_t_kernel(%arg0: i32, %arg1: i32, %arg2: memref<128x128xf32, #tpu.memory_space<vmem>>, %arg3: memref<128x128xf32, #tpu.memory_space<vmem>>, %arg4: memref<128x128xf32, #tpu.memory_space<vmem>>, %arg5: memref<128x128xf32, #tpu.memory_space<vmem>>) attributes {dimension_semantics = [#tpu.dimension_semantics<parallel>, #tpu.dimension_semantics<parallel>], iteration_bounds = array<i64: 1, 1>, scalar_prefetch = 0 : i64, scratch_operands = 0 : i64, tpu.core_type = #tpu.core_type<tc>, window_params = [{transform_indices = @transform_0, window_bounds = array<i64: 128, 128>}, {transform_indices = @transform_1, window_bounds = array<i64: 128, 128>}, {transform_indices = @transform_2, window_bounds = array<i64: 128, 128>}, {transform_indices = @transform_3, window_bounds = array<i64: 128, 128>}]} {
    %c0 = arith.constant 0 : index
    %c0_0 = arith.constant 0 : index
    %0 = vector.load %arg2[%c0, %c0_0] : memref<128x128xf32, #tpu.memory_space<vmem>>, vector<128x128xf32>
    %1 = math.exp %0 : vector<128x128xf32>
    %c0_1 = arith.constant 0 : index
    %c0_2 = arith.constant 0 : index
    %2 = vector.load %arg3[%c0_1, %c0_2] : memref<128x128xf32, #tpu.memory_space<vmem>>, vector<128x128xf32>
    %3 = arith.mulf %1, %2 : vector<128x128xf32>
    %c0_3 = arith.constant 0 : index
    %c0_4 = arith.constant 0 : index
    %4 = vector.load %arg4[%c0_3, %c0_4] : memref<128x128xf32, #tpu.memory_space<vmem>>, vector<128x128xf32>
    %5 = arith.mulf %0, %4 : vector<128x128xf32>
    %6 = arith.addf %3, %5 : vector<128x128xf32>
    %c0_5 = arith.constant 0 : index
    %c0_6 = arith.constant 0 : index
    %7 = vector.load %arg5[%c0_5, %c0_6] : memref<128x128xf32, #tpu.memory_space<vmem>>, vector<128x128xf32>
    tpu.vector_store %arg5[%c0_5, %c0_6], %6 {strides = array<i32>} : memref<128x128xf32, #tpu.memory_space<vmem>>, vector<128x128xf32>,
    return
  }
  func.func @transform_0(%arg0: i32, %arg1: i32) -> (i32, i32) {
    %c0_i32 = arith.constant 0 : i32
    return %arg0, %arg1 : i32, i32
  }
  func.func @transform_1(%arg0: i32, %arg1: i32) -> (i32, i32) {
    %c0_i32 = arith.constant 0 : i32
    return %arg0, %arg1 : i32, i32
  }
  func.func @transform_2(%arg0: i32, %arg1: i32) -> (i32, i32) {
    %c0_i32 = arith.constant 0 : i32
    return %arg0, %arg1 : i32, i32
  }
  func.func @transform_3(%arg0: i32, %arg1: i32) -> (i32, i32) {
    %c0_i32 = arith.constant 0 : i32
    return %arg0, %arg1 : i32, i32
  }
}

</mosaic_0001>

<llo_original>
// kernel: tpu_custom_call.1
$region0: #{tpu_custom_call.1}
  #allocation0 [shape = 'u32[]', space=smem, size = 0x4, offset = 0x4, fixed_abs, tag = 'smem constant byte address 0x4 - core index']
  #allocation1 [shape = 'u32[144,128]{1,0:T(1,128)}', space=vmem, size = 0x12000, scoped, tag = 'internal scratch']
  %s0 = inlined_call_operand.hbm [shape: f32[128,128], index: 0, kind: input, shape index: {}]
  %s1 = inlined_call_operand.hbm [shape: f32[128,128], index: 1, kind: input, shape index: {}]
  %s2 = inlined_call_operand.hbm [shape: f32[128,128], index: 2, kind: input, shape index: {}]
  %s3 = inlined_call_operand.hbm [shape: f32[128,128], index: 3, kind: output, shape index: {}]
  %s4 = sld [smem:[#allocation0]]
  $region34: #{tpu_custom_call.1} parent=0
    _
  %s6 = ssub.s32 1, %s4
  %s7 = scalar_select 0, %s6, %s4
  $region1: #{tpu_custom_call.1} parent=0
    #allocation2 [shape = 'u8[65536]{0}', space=vmem, size = 0x10000, scoped, tag = 'input window, operand 0, single buffered']
    #allocation3 [shape = 's32[1]{0}', space=sflag, size = 0x4, scoped, tag = 'scoped memory for tpu_custom_call.1']
    #allocation4 [shape = 's32[1]{0}', space=sflag, size = 0x4, scoped, tag = 'scoped memory for tpu_custom_call.1']
    #allocation5 [shape = 'u8[65536]{0}', space=vmem, size = 0x10000, scoped, tag = 'input window, operand 1, single buffered']
    #allocation6 [shape = 's32[1]{0}', space=sflag, size = 0x4, scoped, tag = 'scoped memory for tpu_custom_call.1']
    #allocation7 [shape = 'u8[65536]{0}', space=vmem, size = 0x10000, scoped, tag = 'input window, operand 2, single buffered']
    #allocation8 [shape = 'u8[65536]{0}', space=vmem, size = 0x10000, scoped, tag = 'output window, operand 0, single buffered']
    %8 = vsyncpa [#allocation3], 0
    %9 = vsyncpa [#allocation6], 0
    %10 = vsyncpa [#allocation4], 0
    // Predicated region
    $region2: #{tpu_custom_call.1} parent=1 // pred_check
      _
    $region3: #{tpu_custom_call.1} parent=1 // pred_check_branch
      %12 = sbr.rel (0) target = $region5
    $region4: #{tpu_custom_call.1} parent=1 // pred_region
      %s14 = ssub.s32 2048, 2048
      %15 = vsyncadd [#allocation3], %s14
      %s16 = sshll.u32 [#allocation2], 4
      %s17 = int_to_ptr.vmem [resolvable:$true] %s16
      %22 = dma.hbm_to_vmem [thread:$0]  %s0, 2048, %s17, [#allocation3], 128, 128, 8
    $region5: #{tpu_custom_call.1} parent=1 // pred_fallthru
      _
    // Predicated region
    $region6: #{tpu_custom_call.1} parent=1 // pred_check
      _
    $region7: #{tpu_custom_call.1} parent=1 // pred_check_branch
      %24 = sbr.rel (0) target = $region9
    $region8: #{tpu_custom_call.1} parent=1 // pred_region
      %s26 = ssub.s32 2048, 2048
      %27 = vsyncadd [#allocation6], %s26
      %s28 = sshll.u32 [#allocation5], 4
      %s29 = int_to_ptr.vmem [resolvable:$true] %s28
      %34 = dma.hbm_to_vmem [thread:$0]  %s1, 2048, %s29, [#allocation6], 128, 128, 8
    $region9: #{tpu_custom_call.1} parent=1 // pred_fallthru
      _
    // Predicated region
    $region10: #{tpu_custom_call.1} parent=1 // pred_check
      _
    $region11: #{tpu_custom_call.1} parent=1 // pred_check_branch
      %36 = sbr.rel (0) target = $region13
    $region12: #{tpu_custom_call.1} parent=1 // pred_region
      %s38 = ssub.s32 2048, 2048
      %39 = vsyncadd [#allocation6], %s38
      %s40 = sshll.u32 [#allocation7], 4
      %s41 = int_to_ptr.vmem [resolvable:$true] %s40
      %46 = dma.hbm_to_vmem [thread:$0]  %s2, 2048, %s41, [#allocation6], 128, 128, 8
    $region13: #{tpu_custom_call.1} parent=1 // pred_fallthru
      _
    // Predicated region
    $region14: #{tpu_custom_call.1} parent=1 // pred_check
      _
    $region15: #{tpu_custom_call.1} parent=1 // pred_check_branch
      %48 = sbr.rel (0) target = $region17
    $region16: #{tpu_custom_call.1} parent=1 // pred_region
      %49 = dma.done [#allocation3], 2048
    $region17: #{tpu_custom_call.1} parent=1 // pred_fallthru
      _
    // Predicated region
    $region18: #{tpu_custom_call.1} parent=1 // pred_check
      _
    $region19: #{tpu_custom_call.1} parent=1 // pred_check_branch
      %51 = sbr.rel (0) target = $region21
    $region20: #{tpu_custom_call.1} parent=1 // pred_region
      %52 = dma.done [#allocation6], 2048
    $region21: #{tpu_custom_call.1} parent=1 // pred_fallthru
      _
    // Predicated region
    $region22: #{tpu_custom_call.1} parent=1 // pred_check
      _
    $region23: #{tpu_custom_call.1} parent=1 // pred_check_branch
      %54 = sbr.rel (0) target = $region25
    $region24: #{tpu_custom_call.1} parent=1 // pred_region
      %55 = dma.done [#allocation6], 2048
    $region25: #{tpu_custom_call.1} parent=1 // pred_fallthru
      _
    %v56 = vld [vmem:[#allocation2] sm:$0xff]
    %v57 = vld [vmem:[#allocation2 + $0x8] sm:$0xff]
    %v58 = vld [vmem:[#allocation2 + $0x10] sm:$0xff]
    %v59 = vld [vmem:[#allocation2 + $0x18] sm:$0xff]
    %v60 = vld [vmem:[#allocation2 + $0x20] sm:$0xff]
    %v61 = vld [vmem:[#allocation2 + $0x28] sm:$0xff]
    %v62 = vld [vmem:[#allocation2 + $0x30] sm:$0xff]
    %v63 = vld [vmem:[#allocation2 + $0x38] sm:$0xff]
    %v64 = vld [vmem:[#allocation2 + $0x40] sm:$0xff]
    %v65 = vld [vmem:[#allocation2 + $0x48] sm:$0xff]
    %v66 = vld [vmem:[#allocation2 + $0x50] sm:$0xff]
    %v67 = vld [vmem:[#allocation2 + $0x58] sm:$0xff]
    %v68 = vld [vmem:[#allocation2 + $0x60] sm:$0xff]
    %v69 = vld [vmem:[#allocation2 + $0x68] sm:$0xff]
    %v70 = vld [vmem:[#allocation2 + $0x70] sm:$0xff]
    %v71 = vld [vmem:[#allocation2 + $0x78] sm:$0xff]
    %v72 = vmul.f32 %v56, 1.442695
    %v73 = vpow.pop %v72
    %v74 = vmul.f32 %v57, 1.442695
    %v75 = vpow.pop %v74
    %v76 = vmul.f32 %v58, 1.442695
    %v77 = vpow.pop %v76
    %v78 = vmul.f32 %v59, 1.442695
    %v79 = vpow.pop %v78
    %v80 = vmul.f32 %v60, 1.442695
    %v81 = vpow.pop %v80
    %v82 = vmul.f32 %v61, 1.442695
    %v83 = vpow.pop %v82
    %v84 = vmul.f32 %v62, 1.442695
    %v85 = vpow.pop %v84
    %v86 = vmul.f32 %v63, 1.442695
    %v87 = vpow.pop %v86
    %v88 = vmul.f32 %v64, 1.442695
    %v89 = vpow.pop %v88
    %v90 = vmul.f32 %v65, 1.442695
    %v91 = vpow.pop %v90
    %v92 = vmul.f32 %v66, 1.442695
    %v93 = vpow.pop %v92
    %v94 = vmul.f32 %v67, 1.442695
    %v95 = vpow.pop %v94
    %v96 = vmul.f32 %v68, 1.442695
    %v97 = vpow.pop %v96
    %v98 = vmul.f32 %v69, 1.442695
    %v99 = vpow.pop %v98
    %v100 = vmul.f32 %v70, 1.442695
    %v101 = vpow.pop %v100
    %v102 = vmul.f32 %v71, 1.442695
    %v103 = vpow.pop %v102
    %v104 = vld [vmem:[#allocation5] sm:$0xff]
    %v105 = vld [vmem:[#allocation5 + $0x8] sm:$0xff]
    %v106 = vld [vmem:[#allocation5 + $0x10] sm:$0xff]
    %v107 = vld [vmem:[#allocation5 + $0x18] sm:$0xff]
    %v108 = vld [vmem:[#allocation5 + $0x20] sm:$0xff]
    %v109 = vld [vmem:[#allocation5 + $0x28] sm:$0xff]
    %v110 = vld [vmem:[#allocation5 + $0x30] sm:$0xff]
    %v111 = vld [vmem:[#allocation5 + $0x38] sm:$0xff]
    %v112 = vld [vmem:[#allocation5 + $0x40] sm:$0xff]
    %v113 = vld [vmem:[#allocation5 + $0x48] sm:$0xff]
    %v114 = vld [vmem:[#allocation5 + $0x50] sm:$0xff]
    %v115 = vld [vmem:[#allocation5 + $0x58] sm:$0xff]
    %v116 = vld [vmem:[#allocation5 + $0x60] sm:$0xff]
    %v117 = vld [vmem:[#allocation5 + $0x68] sm:$0xff]
    %v118 = vld [vmem:[#allocation5 + $0x70] sm:$0xff]
    %v119 = vld [vmem:[#allocation5 + $0x78] sm:$0xff]
    %v120 = vmul.f32 %v73, %v104
    %v121 = vmul.f32 %v75, %v105
    %v122 = vmul.f32 %v77, %v106
    %v123 = vmul.f32 %v79, %v107
    %v124 = vmul.f32 %v81, %v108
    %v125 = vmul.f32 %v83, %v109
    %v126 = vmul.f32 %v85, %v110
    %v127 = vmul.f32 %v87, %v111
    %v128 = vmul.f32 %v89, %v112
    %v129 = vmul.f32 %v91, %v113
    %v130 = vmul.f32 %v93, %v114
    %v131 = vmul.f32 %v95, %v115
    %v132 = vmul.f32 %v97, %v116
    %v133 = vmul.f32 %v99, %v117
    %v134 = vmul.f32 %v101, %v118
    %v135 = vmul.f32 %v103, %v119
    %v136 = vld [vmem:[#allocation7] sm:$0xff]
    %v137 = vld [vmem:[#allocation7 + $0x8] sm:$0xff]
    %v138 = vld [vmem:[#allocation7 + $0x10] sm:$0xff]
    %v139 = vld [vmem:[#allocation7 + $0x18] sm:$0xff]
    %v140 = vld [vmem:[#allocation7 + $0x20] sm:$0xff]
    %v141 = vld [vmem:[#allocation7 + $0x28] sm:$0xff]
    %v142 = vld [vmem:[#allocation7 + $0x30] sm:$0xff]
    %v143 = vld [vmem:[#allocation7 + $0x38] sm:$0xff]
    %v144 = vld [vmem:[#allocation7 + $0x40] sm:$0xff]
    %v145 = vld [vmem:[#allocation7 + $0x48] sm:$0xff]
    %v146 = vld [vmem:[#allocation7 + $0x50] sm:$0xff]
    %v147 = vld [vmem:[#allocation7 + $0x58] sm:$0xff]
    %v148 = vld [vmem:[#allocation7 + $0x60] sm:$0xff]
    %v149 = vld [vmem:[#allocation7 + $0x68] sm:$0xff]
    %v150 = vld [vmem:[#allocation7 + $0x70] sm:$0xff]
    %v151 = vld [vmem:[#allocation7 + $0x78] sm:$0xff]
    %v152 = vmul.f32 %v56, %v136
    %v153 = vmul.f32 %v57, %v137
    %v154 = vmul.f32 %v58, %v138
    %v155 = vmul.f32 %v59, %v139
    %v156 = vmul.f32 %v60, %v140
    %v157 = vmul.f32 %v61, %v141
    %v158 = vmul.f32 %v62, %v142
    %v159 = vmul.f32 %v63, %v143
    %v160 = vmul.f32 %v64, %v144
    %v161 = vmul.f32 %v65, %v145
    %v162 = vmul.f32 %v66, %v146
    %v163 = vmul.f32 %v67, %v147
    %v164 = vmul.f32 %v68, %v148
    %v165 = vmul.f32 %v69, %v149
    %v166 = vmul.f32 %v70, %v150
    %v167 = vmul.f32 %v71, %v151
    %v168 = vadd.f32 %v120, %v152
    %v169 = vadd.f32 %v121, %v153
    %v170 = vadd.f32 %v122, %v154
    %v171 = vadd.f32 %v123, %v155
    %v172 = vadd.f32 %v124, %v156
    %v173 = vadd.f32 %v125, %v157
    %v174 = vadd.f32 %v126, %v158
    %v175 = vadd.f32 %v127, %v159
    %v176 = vadd.f32 %v128, %v160
    %v177 = vadd.f32 %v129, %v161
    %v178 = vadd.f32 %v130, %v162
    %v179 = vadd.f32 %v131, %v163
    %v180 = vadd.f32 %v132, %v164
    %v181 = vadd.f32 %v133, %v165
    %v182 = vadd.f32 %v134, %v166
    %v183 = vadd.f32 %v135, %v167
    %184 = vst [vmem:[#allocation8] sm:$0xff] %v168
    %185 = vst [vmem:[#allocation8 + $0x8] sm:$0xff] %v169
    %186 = vst [vmem:[#allocation8 + $0x10] sm:$0xff] %v170
    %187 = vst [vmem:[#allocation8 + $0x18] sm:$0xff] %v171
    %188 = vst [vmem:[#allocation8 + $0x20] sm:$0xff] %v172
    %189 = vst [vmem:[#allocation8 + $0x28] sm:$0xff] %v173
    %190 = vst [vmem:[#allocation8 + $0x30] sm:$0xff] %v174
    %191 = vst [vmem:[#allocation8 + $0x38] sm:$0xff] %v175
    %192 = vst [vmem:[#allocation8 + $0x40] sm:$0xff] %v176
    %193 = vst [vmem:[#allocation8 + $0x48] sm:$0xff] %v177
    %194 = vst [vmem:[#allocation8 + $0x50] sm:$0xff] %v178
    %195 = vst [vmem:[#allocation8 + $0x58] sm:$0xff] %v179
    %196 = vst [vmem:[#allocation8 + $0x60] sm:$0xff] %v180
    %197 = vst [vmem:[#allocation8 + $0x68] sm:$0xff] %v181
    %198 = vst [vmem:[#allocation8 + $0x70] sm:$0xff] %v182
    %199 = vst [vmem:[#allocation8 + $0x78] sm:$0xff] %v183
    // Predicated region
    $region26: #{tpu_custom_call.1} parent=1 // pred_check
      _
    $region27: #{tpu_custom_call.1} parent=1 // pred_check_branch
      %201 = sbr.rel (0) target = $region29
    $region28: #{tpu_custom_call.1} parent=1 // pred_region
      %s203 = ssub.s32 2048, 2048
      %204 = vsyncadd [#allocation4], %s203
      %s205 = sshll.u32 [#allocation8], 4
      %s206 = int_to_ptr.vmem [resolvable:$true] %s205
      %211 = dma.vmem_to_hbm [thread:$0]  %s206, 2048, %s3, [#allocation4], 128, 128, 8
    $region29: #{tpu_custom_call.1} parent=1 // pred_fallthru
      _
    // Predicated region
    $region30: #{tpu_custom_call.1} parent=1 // pred_check
      _
    $region31: #{tpu_custom_call.1} parent=1 // pred_check_branch
      %213 = sbr.rel (0) target = $region33
    $region32: #{tpu_custom_call.1} parent=1 // pred_region
      %214 = dma.done [#allocation4], 2048
    $region33: #{tpu_custom_call.1} parent=1 // pred_fallthru
      _
    %215 = vsyncpa [#allocation3], 1
    %216 = vsyncpa [#allocation6], 1
    %217 = vsyncpa [#allocation4], 1

</llo_original>
